<compile_context>
chip_gen: v5e
topology: v5e:2x2
jax: 0.10.0
libtpu: 0.0.40
codegen_flags: <defaults>
</compile_context>

<pallas_src>
import jax
import jax.numpy as jnp
from jax.experimental import pallas as pl
from jax.experimental.pallas import tpu as pltpu


def ffn_header_kernel(x_ref, w1_ref, b1_ref, w2_ref, b2_ref, o_ref):
    # In-kernel bf16 cast (VPU) -> MXU matmul with f32 accumulation.
    x = x_ref[...].astype(jnp.bfloat16)
    h = jnp.dot(x, w1_ref[...], preferred_element_type=jnp.float32)
    # bias + ReLU in f32 on the VPU.
    h = jnp.maximum(h + b1_ref[...], 0.0)
    # dropout (eval mode): identity.
    # layer2 (output width 1): VPU multiply + XLU cross-lane reduce against a
    # [1, H] w2 row; store a natural sublane-major [bm, 1] block.
    out = jnp.sum(h * w2_ref[...], axis=-1, keepdims=True) + b2_ref[0]
    o_ref[...] = out.astype(o_ref.dtype)


def _round_up(n, m):
    return ((n + m - 1) // m) * m


def ffn_header(x, w1, b1, w2, b2, *, bm=512):
    """Fused Linear -> ReLU -> Dropout(eval) -> Linear.

    x:  [B, C_in]   float32 (cast to bf16 inside the kernel)
    w1: [C_in, H]   layer1 weight (pre-transposed)
    b1: [1, H]      layer1 bias
    w2: [1, H]      layer2 weight as a row
    b2: [1]         layer2 bias (scalar)
    returns [B, 1] in x.dtype
    """
    B, C_in = x.shape
    H = w1.shape[1]

    # Generation-aware batch tile: large tiles amortize the ~0.35 us per-step
    # pipeline overhead (this kernel is HBM-bound on x), but keep >=2 grid steps
    # when B is small so both v7x TensorCores get work under "parallel".
    if B <= bm:
        bm = min(bm, max(128, _round_up((B + 1) // 2, 8)))
    bm = max(8, min(bm, _round_up(B, 8)))
    n_tiles = pl.cdiv(B, bm)  # ragged last tile handled by Pallas masking

    # Weights cast once (tiny, persistent); x is cast inside the kernel.
    w1_bf = w1.astype(jnp.bfloat16)
    b1_f = b1.astype(jnp.float32).reshape(1, H)
    w2_row = w2.astype(jnp.float32).reshape(1, H)
    b2_s = b2.astype(jnp.float32).reshape(1)

    # Explicit VMEM budget from the actual tile footprints (+2x headroom).
    # Matters for v5e's ~16 MiB and v7x's 32 MiB scoped defaults.
    h_pad = _round_up(H, 128)
    need = (2 * bm * C_in * 4          # double-buffered f32 x tile
            + C_in * h_pad * 2         # W1 bf16, single-buffered (Buffered(1))
            + 2 * 8 * h_pad * 4        # b1 / w2 rows (padded (8,128) tiles)
            + 2 * bm * 128 * 4         # out [bm,1] block (lane-padded), 2 buffers
            + bm * h_pad * 4)          # live f32 intermediate h
    vmem_limit = int(min(max(2 * need, 32 << 20), 64 << 20))

    out = pl.pallas_call(
        ffn_header_kernel,
        out_shape=jax.ShapeDtypeStruct((B, 1), x.dtype),
        grid_spec=pltpu.PrefetchScalarGridSpec(
            num_scalar_prefetch=0,
            grid=(n_tiles,),
            in_specs=[
                pl.BlockSpec((bm, C_in), lambda i: (i, 0)),          # x tile
                pl.BlockSpec((C_in, H), lambda i: (0, 0),
                             pipeline_mode=pl.Buffered(1)),          # W1 resident
                pl.BlockSpec((1, H), lambda i: (0, 0),
                             pipeline_mode=pl.Buffered(1)),          # b1
                pl.BlockSpec((1, H), lambda i: (0, 0),
                             pipeline_mode=pl.Buffered(1)),          # w2 row
                pl.BlockSpec(memory_space=pltpu.MemorySpace.SMEM),   # b2 scalar
            ],
            out_specs=pl.BlockSpec((bm, 1), lambda i: (i, 0)),
        ),
        compiler_params=pltpu.CompilerParams(
            dimension_semantics=("parallel",),   # shards batch tiles across v7x TCs
            vmem_limit_bytes=vmem_limit,
        ),
    )(x, w1_bf, b1_f, w2_row, b2_s)
    return out


def init_params(key, in_channels, hidden_channels, dtype=jnp.float32):
    """Deterministic init mimicking PyTorch nn.Linear default (uniform +-1/sqrt(fan_in))."""
    k1, k2, k3, k4 = jax.random.split(key, 4)
    bound1 = 1.0 / (in_channels ** 0.5)
    bound2 = 1.0 / (hidden_channels ** 0.5)
    w1 = jax.random.uniform(k1, (in_channels, hidden_channels), dtype, -bound1, bound1)
    b1 = jax.random.uniform(k2, (1, hidden_channels), dtype, -bound1, bound1)
    w2 = jax.random.uniform(k3, (1, hidden_channels), dtype, -bound2, bound2)  # row form
    b2 = jax.random.uniform(k4, (1,), dtype, -bound2, bound2)
    return w1, b1, w2, b2


if __name__ == "__main__":
    key = jax.random.PRNGKey(0)
    kx, kp = jax.random.split(key)

    # Small but non-trivial: B=200 -> bm=128, a 2-step grid (both v7x TCs busy)
    # with a ragged last tile (72 valid rows), exercising the masked writeback.
    B, C_in, H = 200, 32, 64
    x = jax.random.normal(kx, (B, C_in), jnp.float32)
    w1, b1, w2, b2 = init_params(kp, C_in, H)

    out = ffn_header(x, w1, b1, w2, b2)
    out = jax.block_until_ready(out)
    assert out.shape == (B, 1)

    # Reference (pure JAX) using the same bf16-matmul / f32-accumulate recipe.
    h_ref = jnp.maximum(
        jnp.dot(x.astype(jnp.bfloat16), w1.astype(jnp.bfloat16),
                preferred_element_type=jnp.float32) + b1.reshape(1, H), 0.0)
    ref = jnp.sum(h_ref * w2.reshape(1, H), axis=-1, keepdims=True) + b2.reshape(1, 1)
    assert jnp.allclose(out, ref.astype(out.dtype), atol=2e-3, rtol=2e-3), \
        float(jnp.max(jnp.abs(out - ref)))

    print("KERNEL_OK")
</pallas_src>

<mosaic_0001>
module attributes {stable_mosaic.version = 11 : i64} {
  func.func @ffn_header_kernel(%arg0: i32, %arg1: memref<128x32xf32, #tpu.memory_space<vmem>>, %arg2: memref<32x64xbf16, #tpu.memory_space<vmem>>, %arg3: memref<1x64xf32, #tpu.memory_space<vmem>>, %arg4: memref<1x64xf32, #tpu.memory_space<vmem>>, %arg5: memref<1xf32, #tpu.memory_space<smem>>, %arg6: memref<128x1xf32, #tpu.memory_space<vmem>>) attributes {dimension_semantics = [#tpu.dimension_semantics<parallel>], iteration_bounds = array<i64: 2>, scalar_prefetch = 0 : i64, scratch_operands = 0 : i64, tpu.core_type = #tpu.core_type<tc>, window_params = [{transform_indices = @transform_0, window_bounds = array<i64: 128, 32>}, {pipeline_mode = #tpu.pipeline_mode<synchronous>, transform_indices = @transform_1, window_bounds = array<i64: 32, 64>}, {pipeline_mode = #tpu.pipeline_mode<synchronous>, transform_indices = @transform_2, window_bounds = array<i64: 1, 64>}, {pipeline_mode = #tpu.pipeline_mode<synchronous>, transform_indices = @transform_3, window_bounds = array<i64: 1, 64>}, {transform_indices = @transform_4, window_bounds = array<i64: 1>}, {transform_indices = @transform_5, window_bounds = array<i64: 128, 1>}]} {
    %c0 = arith.constant 0 : index
    %c0_0 = arith.constant 0 : index
    %0 = vector.load %arg1[%c0, %c0_0] : memref<128x32xf32, #tpu.memory_space<vmem>>, vector<128x32xf32>
    %1 = arith.truncf %0 : vector<128x32xf32> to vector<128x32xbf16>
    %c0_1 = arith.constant 0 : index
    %c0_2 = arith.constant 0 : index
    %2 = vector.load %arg2[%c0_1, %c0_2] : memref<32x64xbf16, #tpu.memory_space<vmem>>, vector<32x64xbf16>
    %cst = arith.constant dense<0.000000e+00> : vector<128x64xf32>
    %3 = tpu.matmul %1, %2, %cst {dimension_numbers = #tpu.dot_dimension_numbers<[1], [0], [0], [1], [0, 0, 1, 1], [], []>} : vector<128x32xbf16>, vector<32x64xbf16>, vector<128x64xf32> -> vector<128x64xf32>
    %c0_3 = arith.constant 0 : index
    %c0_4 = arith.constant 0 : index
    %4 = vector.load %arg3[%c0_3, %c0_4] : memref<1x64xf32, #tpu.memory_space<vmem>>, vector<1x64xf32>
    %5 = vector.broadcast %4 : vector<1x64xf32> to vector<128x64xf32>
    %6 = arith.addf %3, %5 : vector<128x64xf32>
    %cst_5 = arith.constant 0.000000e+00 : f32
    %7 = vector.broadcast %cst_5 : f32 to vector<128x64xf32>
    %8 = arith.maximumf %6, %7 : vector<128x64xf32>
    %c0_6 = arith.constant 0 : index
    %c0_7 = arith.constant 0 : index
    %9 = vector.load %arg4[%c0_6, %c0_7] : memref<1x64xf32, #tpu.memory_space<vmem>>, vector<1x64xf32>
    %10 = vector.broadcast %9 : vector<1x64xf32> to vector<128x64xf32>
    %11 = arith.mulf %8, %10 : vector<128x64xf32>
    %cst_8 = arith.constant dense<0.000000e+00> : vector<128xf32>
    %12 = vector.multi_reduction <add>, %11, %cst_8 [1] : vector<128x64xf32> to vector<128xf32>
    %13 = vector.shape_cast %12 : vector<128xf32> to vector<128x1xf32>
    %c0_9 = arith.constant 0 : index
    %14 = memref.load %arg5[%c0_9] : memref<1xf32, #tpu.memory_space<smem>>
    %15 = vector.broadcast %14 : f32 to vector<128x1xf32>
    %16 = arith.addf %13, %15 : vector<128x1xf32>
    %c0_10 = arith.constant 0 : index
    %c0_11 = arith.constant 0 : index
    %17 = vector.load %arg6[%c0_10, %c0_11] : memref<128x1xf32, #tpu.memory_space<vmem>>, vector<128x1xf32>
    tpu.vector_store %arg6[%c0_10, %c0_11], %16 {strides = array<i32>} : memref<128x1xf32, #tpu.memory_space<vmem>>, vector<128x1xf32>,
    return
  }
  func.func @transform_0(%arg0: i32) -> (i32, i32) {
    %c0_i32 = arith.constant 0 : i32
    %c0_i32_0 = arith.constant 0 : i32
    return %arg0, %c0_i32 : i32, i32
  }
  func.func @transform_1(%arg0: i32) -> (i32, i32) {
    %c0_i32 = arith.constant 0 : i32
    %c0_i32_0 = arith.constant 0 : i32
    %c0_i32_1 = arith.constant 0 : i32
    return %c0_i32, %c0_i32_0 : i32, i32
  }
  func.func @transform_2(%arg0: i32) -> (i32, i32) {
    %c0_i32 = arith.constant 0 : i32
    %c0_i32_0 = arith.constant 0 : i32
    %c0_i32_1 = arith.constant 0 : i32
    return %c0_i32, %c0_i32_0 : i32, i32
  }
  func.func @transform_3(%arg0: i32) -> (i32, i32) {
    %c0_i32 = arith.constant 0 : i32
    %c0_i32_0 = arith.constant 0 : i32
    %c0_i32_1 = arith.constant 0 : i32
    return %c0_i32, %c0_i32_0 : i32, i32
  }
  func.func @transform_4(%arg0: i32) -> i32 {
    %c0_i32 = arith.constant 0 : i32
    %c0_i32_0 = arith.constant 0 : i32
    return %c0_i32 : i32
  }
  func.func @transform_5(%arg0: i32) -> (i32, i32) {
    %c0_i32 = arith.constant 0 : i32
    %c0_i32_0 = arith.constant 0 : i32
    return %arg0, %c0_i32 : i32, i32
  }
}

</mosaic_0001>

<llo_original>
// kernel: tpu_custom_call.1
$region0: #{tpu_custom_call.1}
  #allocation0 [shape = 'u32[]', space=smem, size = 0x4, offset = 0x4, fixed_abs, tag = 'smem constant byte address 0x4 - core index']
  #allocation1 [shape = 'u32[72,128]{1,0:T(1,128)}', space=vmem, size = 0x9000, scoped, tag = 'internal scratch']
  #allocation2 [shape = 'f32[1]{0:T(128)S(6)}', space=smem, size = 0x200, scoped, tag = 'scoped memory for tpu_custom_call.1']
  %s0 = inlined_call_operand.vmem [shape: f32[200,32], index: 0, kind: input, shape index: {}]
  %s1 = inlined_call_operand.vmem [shape: bf16[32,64], index: 1, kind: input, shape index: {}]
  %s2 = inlined_call_operand.vmem [shape: f32[1,64], index: 2, kind: input, shape index: {}]
  %s3 = inlined_call_operand.vmem [shape: f32[1,64], index: 3, kind: input, shape index: {}]
  %s4 = inlined_call_operand.<no memory space> [shape: f32[1], index: 4, kind: input, shape index: {}]
  %s5 = inlined_call_operand.vmem [shape: f32[200,1], index: 5, kind: output, shape index: {}]
  %s6 = sld [smem:[#allocation0]]
  $region101: #{tpu_custom_call.1} parent=0
    _
  %s8 = ssub.s32 1, %s6
  %s9 = scalar_select 0, %s8, %s6
  %10 = sst [smem:[#allocation2]] %s4
  $region1: #{tpu_custom_call.1} parent=0
    #allocation3 [shape = 'u8[131072]{0}', space=vmem, size = 0x20000, scoped, tag = 'output window, operand 0']
    loop: start=0, step=1, limit=4
    $region2: #{tpu_custom_call.1} parent=1 // loop_pre_header
      _
    $region3: #{tpu_custom_call.1} parent=1 // loop_header
      %s12 = sphi 0, %s16
      %p13 = scmp.ge.s32.totalorder %s12, 4
      %s22 = sphi 0, %s24
      %s25 = sphi 0, %s22
      %s26 = sphi 0, %s25
      %s42 = sphi 0, %s26
      %s46 = sphi 0, %s46
      %s48 = sphi 0, %s46
      %s49 = sphi 0, %s48
      %s63 = sphi 0, %s49
      %s67 = sphi 0, %s67
      %s69 = sphi 0, %s67
      %s70 = sphi 0, %s69
      %s84 = sphi 0, %s70
      %s88 = sphi 0, %s88
      %s90 = sphi 0, %s88
      %s91 = sphi 0, %s90
      %s105 = sphi 0, %s91
      %s109 = sphi 0, %s109
      %s111 = sphi 0, %s109
      %s112 = sphi 0, %s111
      %s126 = sphi 0, %s112
      %s132 = sphi 0, %s134
      %s135 = sphi 0, %s132
      %s136 = sphi 0, %s135
      %s152 = sphi 0, %s136
    $region4: #{tpu_custom_call.1} parent=1 // loop_header_branch
      %15 = sbr.rel (%p13) target = $region8
    $region5: #{tpu_custom_call.1} parent=1 // loop_body
      %s17 = ssub.s32 %s12, 1
      %s18 = ssub.s32 %s12, 2
      %s19 = sadd.s32 %s12, 1
      %s20 = ssub.s32 %s12, %s19
      %p21 = scmp.eq.s32.totalorder %s20, 0
      %s23 = sadd.s32 %s22, 1
      %s24 = scalar_select %p21, %s22, %s23
      %p27 = pneg %p21
      %p28 = scmp.eq.s32.totalorder %s12, 1
      %p29 = por %p27, %p28
      %p30 = scmp.ne.s32.totalorder %s22, %s25
      %p31 = scmp.eq.s32.totalorder %s12, 0
      %p32 = por %p30, %p31
      %p33 = scmp.ne.s32.totalorder %s22, %s25
      %p34 = scmp.eq.s32.totalorder %s17, 1
      %p35 = por %p33, %p34
      %p36 = scmp.ne.s32.totalorder %s25, %s26
      %p37 = scmp.eq.s32.totalorder %s17, 0
      %p38 = por %p36, %p37
      %p39 = scmp.ne.s32.totalorder %s25, %s26
      %p40 = scmp.eq.s32.totalorder %s18, 1
      %p41 = por %p39, %p40
      %p43 = scmp.ne.s32.totalorder %s26, %s42
      %p44 = scmp.eq.s32.totalorder %s18, 0
      %p45 = por %p43, %p44
      %s47 = sadd.s32 %s46, 1
      %p50 = scmp.eq.s32.totalorder %s12, 1
      %p51 = scmp.ne.s32.totalorder %s46, %s48
      %p52 = scmp.eq.s32.totalorder %s12, 0
      %p53 = por %p51, %p52
      %p54 = scmp.ne.s32.totalorder %s46, %s48
      %p55 = scmp.eq.s32.totalorder %s17, 1
      %p56 = por %p54, %p55
      %p57 = scmp.ne.s32.totalorder %s48, %s49
      %p58 = scmp.eq.s32.totalorder %s17, 0
      %p59 = por %p57, %p58
      %p60 = scmp.ne.s32.totalorder %s48, %s49
      %p61 = scmp.eq.s32.totalorder %s18, 1
      %p62 = por %p60, %p61
      %p64 = scmp.ne.s32.totalorder %s49, %s63
      %p65 = scmp.eq.s32.totalorder %s18, 0
      %p66 = por %p64, %p65
      %s68 = sadd.s32 %s67, 1
      %p71 = scmp.eq.s32.totalorder %s12, 1
      %p72 = scmp.ne.s32.totalorder %s67, %s69
      %p73 = scmp.eq.s32.totalorder %s12, 0
      %p74 = por %p72, %p73
      %p75 = scmp.ne.s32.totalorder %s67, %s69
      %p76 = scmp.eq.s32.totalorder %s17, 1
      %p77 = por %p75, %p76
      %p78 = scmp.ne.s32.totalorder %s69, %s70
      %p79 = scmp.eq.s32.totalorder %s17, 0
      %p80 = por %p78, %p79
      %p81 = scmp.ne.s32.totalorder %s69, %s70
      %p82 = scmp.eq.s32.totalorder %s18, 1
      %p83 = por %p81, %p82
      %p85 = scmp.ne.s32.totalorder %s70, %s84
      %p86 = scmp.eq.s32.totalorder %s18, 0
      %p87 = por %p85, %p86
      %s89 = sadd.s32 %s88, 1
      %p92 = scmp.eq.s32.totalorder %s12, 1
      %p93 = scmp.ne.s32.totalorder %s88, %s90
      %p94 = scmp.eq.s32.totalorder %s12, 0
      %p95 = por %p93, %p94
      %p96 = scmp.ne.s32.totalorder %s88, %s90
      %p97 = scmp.eq.s32.totalorder %s17, 1
      %p98 = por %p96, %p97
      %p99 = scmp.ne.s32.totalorder %s90, %s91
      %p100 = scmp.eq.s32.totalorder %s17, 0
      %p101 = por %p99, %p100
      %p102 = scmp.ne.s32.totalorder %s90, %s91
      %p103 = scmp.eq.s32.totalorder %s18, 1
      %p104 = por %p102, %p103
      %p106 = scmp.ne.s32.totalorder %s91, %s105
      %p107 = scmp.eq.s32.totalorder %s18, 0
      %p108 = por %p106, %p107
      %s110 = sadd.s32 %s109, 1
      %p113 = scmp.eq.s32.totalorder %s12, 1
      %p114 = scmp.ne.s32.totalorder %s109, %s111
      %p115 = scmp.eq.s32.totalorder %s12, 0
      %p116 = por %p114, %p115
      %p117 = scmp.ne.s32.totalorder %s109, %s111
      %p118 = scmp.eq.s32.totalorder %s17, 1
      %p119 = por %p117, %p118
      %p120 = scmp.ne.s32.totalorder %s111, %s112
      %p121 = scmp.eq.s32.totalorder %s17, 0
      %p122 = por %p120, %p121
      %p123 = scmp.ne.s32.totalorder %s111, %s112
      %p124 = scmp.eq.s32.totalorder %s18, 1
      %p125 = por %p123, %p124
      %p127 = scmp.ne.s32.totalorder %s112, %s126
      %p128 = scmp.eq.s32.totalorder %s18, 0
      %p129 = por %p127, %p128
      %s130 = ssub.s32 %s12, %s19
      %p131 = scmp.eq.s32.totalorder %s130, 0
      %s133 = sadd.s32 %s132, 1
      %s134 = scalar_select %p131, %s132, %s133
      %p137 = pneg %p131
      %p138 = scmp.eq.s32.totalorder %s12, 1
      %p139 = por %p137, %p138
      %p140 = scmp.ne.s32.totalorder %s132, %s135
      %p141 = scmp.eq.s32.totalorder %s12, 0
      %p142 = por %p140, %p141
      %p143 = scmp.ne.s32.totalorder %s132, %s135
      %p144 = scmp.eq.s32.totalorder %s17, 1
      %p145 = por %p143, %p144
      %p146 = scmp.ne.s32.totalorder %s135, %s136
      %p147 = scmp.eq.s32.totalorder %s17, 0
      %p148 = por %p146, %p147
      %p149 = scmp.ne.s32.totalorder %s135, %s136
      %p150 = scmp.eq.s32.totalorder %s18, 1
      %p151 = por %p149, %p150
      %p153 = scmp.ne.s32.totalorder %s136, %s152
      %p154 = scmp.eq.s32.totalorder %s18, 0
      %p155 = por %p153, %p154
      %p156 = scmp.le.s32.totalorder 1, %s12
      %p157 = scmp.lt.s32.totalorder %s12, 3
      %p158 = pnand %p156, %p157
      %p159 = pneg %p158
      // Predicated region
      $region9: #{tpu_custom_call.1} parent=5 // pred_check
        _
      $region10: #{tpu_custom_call.1} parent=5 // pred_check_branch
        %161 = sbr.rel (%p158) target = $region12
      $region11: #{tpu_custom_call.1} parent=5 // pred_region
        %s162 = ssub.s32 %s12, 1
        // Predicated region
        $region13: #{tpu_custom_call.1} parent=11 // pred_check
          %p163 = pneg %p59
        $region14: #{tpu_custom_call.1} parent=11 // pred_check_branch
          %165 = sbr.rel (%p163) target = $region16
        $region15: #{tpu_custom_call.1} parent=11 // pred_region
          _
        $region16: #{tpu_custom_call.1} parent=11 // pred_fallthru
          _
        // Predicated region
        $region17: #{tpu_custom_call.1} parent=11 // pred_check
          %p166 = pneg %p80
        $region18: #{tpu_custom_call.1} parent=11 // pred_check_branch
          %168 = sbr.rel (%p166) target = $region20
        $region19: #{tpu_custom_call.1} parent=11 // pred_region
          _
        $region20: #{tpu_custom_call.1} parent=11 // pred_fallthru
          _
        // Predicated region
        $region21: #{tpu_custom_call.1} parent=11 // pred_check
          %p169 = pneg %p101
        $region22: #{tpu_custom_call.1} parent=11 // pred_check_branch
          %171 = sbr.rel (%p169) target = $region24
        $region23: #{tpu_custom_call.1} parent=11 // pred_region
          _
        $region24: #{tpu_custom_call.1} parent=11 // pred_fallthru
          _
        // Predicated region
        $region25: #{tpu_custom_call.1} parent=11 // pred_check
          %p172 = pneg %p122
        $region26: #{tpu_custom_call.1} parent=11 // pred_check_branch
          %174 = sbr.rel (%p172) target = $region28
        $region27: #{tpu_custom_call.1} parent=11 // pred_region
          _
        $region28: #{tpu_custom_call.1} parent=11 // pred_fallthru
          _
      $region12: #{tpu_custom_call.1} parent=5 // pred_fallthru
        _
      %p175 = scmp.lt.s32.totalorder %s12, 2
      // Predicated region
      $region29: #{tpu_custom_call.1} parent=5 // pred_check
        %p176 = pneg %p175
      $region30: #{tpu_custom_call.1} parent=5 // pred_check_branch
        %178 = sbr.rel (%p176) target = $region32
      $region31: #{tpu_custom_call.1} parent=5 // pred_region
        // Predicated region
        $region33: #{tpu_custom_call.1} parent=31 // pred_check
          %p179 = pneg %p32
        $region34: #{tpu_custom_call.1} parent=31 // pred_check_branch
          %181 = sbr.rel (%p179) target = $region36
        $region35: #{tpu_custom_call.1} parent=31 // pred_region
          %s182 = smul.u32 16, %s12
          %s183 = ssub.s32 25, %s182
          %p184 = scmp.lt.s32.totalorder %s183, 16
          %s185 = scalar_select %p184, %s183, 16
          %s186 = smul.u32 8, %s185
          %p187 = scmp.lt.s32.totalorder %s182, 24
          %s188 = scalar_select %p187, %s182, 24
          %s189 = smul.addr %s188, 8
          %s190 = scalar_lea.vmem %s0, %s189
          %s191 = smul.u32 16, %s12
          %s192 = ssub.s32 25, %s191
          %p193 = scmp.lt.s32.totalorder %s192, 16
          %s194 = scalar_select %p193, %s192, 16
          %s195 = smul.u32 8, %s194
        $region36: #{tpu_custom_call.1} parent=31 // pred_fallthru
          _
      $region32: #{tpu_custom_call.1} parent=5 // pred_fallthru
        _
      %p196 = scmp.le.s32.totalorder 1, %s12
      %p197 = scmp.lt.s32.totalorder %s12, 3
      %p198 = pnand %p196, %p197
      %p199 = pneg %p198
      // Predicated region
      $region37: #{tpu_custom_call.1} parent=5 // pred_check
        _
      $region38: #{tpu_custom_call.1} parent=5 // pred_check_branch
        %201 = sbr.rel (%p198) target = $region40
      $region39: #{tpu_custom_call.1} parent=5 // pred_region
        %s202 = ssub.s32 %s12, 1
        %s203 = smul.u32 16, %s17
        %s204 = ssub.s32 25, %s203
        %p205 = scmp.lt.s32.totalorder %s204, 16
        %s206 = scalar_select %p205, %s204, 16
        %s207 = smul.u32 8, %s206
        %p208 = scmp.lt.s32.totalorder %s203, 24
        %s209 = scalar_select %p208, %s203, 24
        %s210 = smul.addr %s209, 8
        %s211 = scalar_lea.vmem %s0, %s210
        %p212 = pneg %p38
        %p213 = pneg %p35
        %p214 = pneg %p59
        %p215 = pneg %p56
        %p216 = pneg %p80
        %p217 = pneg %p77
        %p218 = pneg %p101
        %p219 = pneg %p98
        %p220 = pneg %p122
        %p221 = pneg %p119
        %p222 = pneg %p148
        %p223 = pneg %p145
        %s224 = sand.u32 %s135, 1
        %s225 = sand.u32 %s135, 1
        %s226 = smul.addr %s225, 128
        %s227 = scalar_lea.vmem [#allocation3], %s226
        %s228 = smul.u32 16, %s17
        %s229 = ssub.s32 25, %s228
        %p230 = scmp.lt.s32.totalorder %s229, 16
        %s231 = scalar_select %p230, %s229, 16
        %s232 = smul.u32 8, %s231
        %p233 = scmp.lt.s32.totalorder %s228, 24
        %s234 = scalar_select %p233, %s228, 24
        %s235 = smul.addr %s234, 8
        %s236 = scalar_lea.vmem %s0, %s235
        %s237 = smul.u32 16, %s17
        %s238 = ssub.s32 25, %s237
        %p239 = scmp.lt.s32.totalorder %s238, 16
        %s240 = scalar_select %p239, %s238, 16
        %s241 = smul.u32 8, %s240
        %s242 = smul.u32 16, %s17
        %s243 = ssub.s32 25, %s242
        %p244 = scmp.lt.s32.totalorder %s243, 16
        %s245 = scalar_select %p244, %s243, 16
        %s246 = smul.u32 8, %s245
        %v248 = vld [vmem:[%s236] sm:$0xff]
        %v249 = vld [vmem:[%s236 + $0x8] sm:$0xff]
        %v250 = vld [vmem:[%s236 + $0x10] sm:$0xff]
        %v251 = vld [vmem:[%s236 + $0x18] sm:$0xff]
        %v252 = vld [vmem:[%s236 + $0x20] sm:$0xff]
        %v253 = vld [vmem:[%s236 + $0x28] sm:$0xff]
        %v254 = vld [vmem:[%s236 + $0x30] sm:$0xff]
        %v255 = vld [vmem:[%s236 + $0x38] sm:$0xff]
        %v256 = vld [vmem:[%s236 + $0x40] sm:$0xff]
        %v257 = vld [vmem:[%s236 + $0x48] sm:$0xff]
        %v258 = vld [vmem:[%s236 + $0x50] sm:$0xff]
        %v259 = vld [vmem:[%s236 + $0x58] sm:$0xff]
        %v260 = vld [vmem:[%s236 + $0x60] sm:$0xff]
        %v261 = vld [vmem:[%s236 + $0x68] sm:$0xff]
        %v262 = vld [vmem:[%s236 + $0x70] sm:$0xff]
        %v263 = vld [vmem:[%s236 + $0x78] sm:$0xff]
        %v264 = vpack.c.bf16 %v249, %v248
        %v265 = vpack.c.bf16 %v251, %v250
        %v266 = vpack.c.bf16 %v253, %v252
        %v267 = vpack.c.bf16 %v255, %v254
        %v268 = vpack.c.bf16 %v257, %v256
        %v269 = vpack.c.bf16 %v259, %v258
        %v270 = vpack.c.bf16 %v261, %v260
        %v271 = vpack.c.bf16 %v263, %v262
        %v272 = vld [vmem:[%s1] sm:$0xf]
        %v273 = vld [vmem:[%s1 + $0x4] sm:$0xf]
        %v274 = vld [vmem:[%s1 + $0x8] sm:$0xf]
        %v275 = vld [vmem:[%s1 + $0xc] sm:$0xf]
        %v276 = vld [vmem:[%s2] sm:$0x1]
        %v278 = vperm.slane %v276, 0
        %v284 = vunpack.c.l.b16 %v272
        %v285 = vunpack.c.l.b16 %v273
        %v286 = vunpack.c.l.b16 %v274
        %v287 = vunpack.c.l.b16 %v275
        %v288 = vpack.c.b16 %v285, %v284
        %v289 = vpack.c.b16 %v287, %v286
        %vm292 = vcmask 261120
        %v294 = vsel %vm292, %v264, 0
        %v297 = vsel %vm292, %v265, 0
        %v300 = vsel %vm292, %v266, 0
        %v303 = vsel %vm292, %v267, 0
        %v306 = vsel %vm292, %v268, 0
        %v309 = vsel %vm292, %v269, 0
        %v312 = vsel %vm292, %v270, 0
        %v315 = vsel %vm292, %v271, 0
        %317 = vmatpush.bf16.msra.mxu0 0
        %318 = vmatpush.bf16.msra.mxu0 0
        %319 = vmatpush.bf16.msra.mxu0 0
        %320 = vmatpush.bf16.msra.mxu0 0
        %321 = vmatpush.bf16.msra.mxu0 0
        %322 = vmatpush.bf16.msra.mxu0 0
        %323 = vmatpush.bf16.msra.mxu0 %v289
        %324 = vmatpush.bf16.msra.mxu0 %v288
        %325 = vmatmul.bf16.gmra.mxu0 %v294
        %v326 = vpop.f32.mrf.mxu0
        %v327 = vadd.f32 %v278, %v326
        %v328 = vpop.f32.mrf.mxu0
        %v329 = vadd.f32 %v278, %v328
        %330 = vmatmul.bf16.gmra.mxu0 %v297
        %v331 = vpop.f32.mrf.mxu0
        %v332 = vadd.f32 %v278, %v331
        %v333 = vpop.f32.mrf.mxu0
        %v334 = vadd.f32 %v278, %v333
        %335 = vmatmul.bf16.gmra.mxu0 %v300
        %v336 = vpop.f32.mrf.mxu0
        %v337 = vadd.f32 %v278, %v336
        %v338 = vpop.f32.mrf.mxu0
        %v339 = vadd.f32 %v278, %v338
        %340 = vmatmul.bf16.gmra.mxu0 %v303
        %v341 = vpop.f32.mrf.mxu0
        %v342 = vadd.f32 %v278, %v341
        %v343 = vpop.f32.mrf.mxu0
        %v344 = vadd.f32 %v278, %v343
        %345 = vmatmul.bf16.gmra.mxu0 %v306
        %v346 = vpop.f32.mrf.mxu0
        %v347 = vadd.f32 %v278, %v346
        %v348 = vpop.f32.mrf.mxu0
        %v349 = vadd.f32 %v278, %v348
        %350 = vmatmul.bf16.gmra.mxu0 %v309
        %v351 = vpop.f32.mrf.mxu0
        %v352 = vadd.f32 %v278, %v351
        %v353 = vpop.f32.mrf.mxu0
        %v354 = vadd.f32 %v278, %v353
        %355 = vmatmul.bf16.gmra.mxu0 %v312
        %v356 = vpop.f32.mrf.mxu0
        %v357 = vadd.f32 %v278, %v356
        %v358 = vpop.f32.mrf.mxu0
        %v359 = vadd.f32 %v278, %v358
        %360 = vmatmul.bf16.gmra.mxu0 %v315
        %v361 = vpop.f32.mrf.mxu0
        %v362 = vadd.f32 %v278, %v361
        %v363 = vpop.f32.mrf.mxu0
        %v364 = vadd.f32 %v278, %v363
        %365 = vdwg.mxu0
        %v366 = vmax.f32 %v327, 0.0
        %v367 = vmax.f32 %v329, 0.0
        %v368 = vmax.f32 %v332, 0.0
        %v369 = vmax.f32 %v334, 0.0
        %v370 = vmax.f32 %v337, 0.0
        %v371 = vmax.f32 %v339, 0.0
        %v372 = vmax.f32 %v342, 0.0
        %v373 = vmax.f32 %v344, 0.0
        %v374 = vmax.f32 %v347, 0.0
        %v375 = vmax.f32 %v349, 0.0
        %v376 = vmax.f32 %v352, 0.0
        %v377 = vmax.f32 %v354, 0.0
        %v378 = vmax.f32 %v357, 0.0
        %v379 = vmax.f32 %v359, 0.0
        %v380 = vmax.f32 %v362, 0.0
        %v381 = vmax.f32 %v364, 0.0
        %v382 = vld [vmem:[%s3] sm:$0x1]
        %v384 = vperm.slane %v382, 0
        %v386 = vmul.f32 %v366, %v384
        %v387 = vmul.f32 %v367, %v384
        %v388 = vmul.f32 %v368, %v384
        %v389 = vmul.f32 %v369, %v384
        %v390 = vmul.f32 %v370, %v384
        %v391 = vmul.f32 %v371, %v384
        %v392 = vmul.f32 %v372, %v384
        %v393 = vmul.f32 %v373, %v384
        %v394 = vmul.f32 %v374, %v384
        %v395 = vmul.f32 %v375, %v384
        %v396 = vmul.f32 %v376, %v384
        %v397 = vmul.f32 %v377, %v384
        %v398 = vmul.f32 %v378, %v384
        %v399 = vmul.f32 %v379, %v384
        %v400 = vmul.f32 %v380, %v384
        %v401 = vmul.f32 %v381, %v384
        %vm402 = vcmask 523264
        %v403 = vsel %vm402, %v386, 0.0
        %404 = vadd.xlane.f32.xlu0 %v403
        %v405 = vpop.xlane.xlu0 %404
        %v406 = vsel %vm402, %v387, 0.0
        %407 = vadd.xlane.f32.xlu0 %v406
        %v408 = vpop.xlane.xlu0 %407
        %v409 = vsel %vm402, %v388, 0.0
        %410 = vadd.xlane.f32.xlu0 %v409
        %v411 = vpop.xlane.xlu0 %410
        %v412 = vsel %vm402, %v389, 0.0
        %413 = vadd.xlane.f32.xlu0 %v412
        %v414 = vpop.xlane.xlu0 %413
        %v415 = vsel %vm402, %v390, 0.0
        %416 = vadd.xlane.f32.xlu0 %v415
        %v417 = vpop.xlane.xlu0 %416
        %v418 = vsel %vm402, %v391, 0.0
        %419 = vadd.xlane.f32.xlu0 %v418
        %v420 = vpop.xlane.xlu0 %419
        %v421 = vsel %vm402, %v392, 0.0
        %422 = vadd.xlane.f32.xlu0 %v421
        %v423 = vpop.xlane.xlu0 %422
        %v424 = vsel %vm402, %v393, 0.0
        %425 = vadd.xlane.f32.xlu0 %v424
        %v426 = vpop.xlane.xlu0 %425
        %v427 = vsel %vm402, %v394, 0.0
        %428 = vadd.xlane.f32.xlu0 %v427
        %v429 = vpop.xlane.xlu0 %428
        %v430 = vsel %vm402, %v395, 0.0
        %431 = vadd.xlane.f32.xlu0 %v430
        %v432 = vpop.xlane.xlu0 %431
        %v433 = vsel %vm402, %v396, 0.0
        %434 = vadd.xlane.f32.xlu0 %v433
        %v435 = vpop.xlane.xlu0 %434
        %v436 = vsel %vm402, %v397, 0.0
        %437 = vadd.xlane.f32.xlu0 %v436
        %v438 = vpop.xlane.xlu0 %437
        %v439 = vsel %vm402, %v398, 0.0
        %440 = vadd.xlane.f32.xlu0 %v439
        %v441 = vpop.xlane.xlu0 %440
        %v442 = vsel %vm402, %v399, 0.0
        %443 = vadd.xlane.f32.xlu0 %v442
        %v444 = vpop.xlane.xlu0 %443
        %v445 = vsel %vm402, %v400, 0.0
        %446 = vadd.xlane.f32.xlu0 %v445
        %v447 = vpop.xlane.xlu0 %446
        %v448 = vsel %vm402, %v401, 0.0
        %449 = vadd.xlane.f32.xlu0 %v448
        %v450 = vpop.xlane.xlu0 %449
        %s451 = sld [smem:[#allocation2]]
        %v452 = vstv %s451
        %v453 = vadd.f32 %v405, %v452
        %v454 = vadd.f32 %v408, %v452
        %v455 = vadd.f32 %v411, %v452
        %v456 = vadd.f32 %v414, %v452
        %v457 = vadd.f32 %v417, %v452
        %v458 = vadd.f32 %v420, %v452
        %v459 = vadd.f32 %v423, %v452
        %v460 = vadd.f32 %v426, %v452
        %v461 = vadd.f32 %v429, %v452
        %v462 = vadd.f32 %v432, %v452
        %v463 = vadd.f32 %v435, %v452
        %v464 = vadd.f32 %v438, %v452
        %v465 = vadd.f32 %v441, %v452
        %v466 = vadd.f32 %v444, %v452
        %v467 = vadd.f32 %v447, %v452
        %v468 = vadd.f32 %v450, %v452
        %vm469 = vcmask 7168
        %470 = vst.msk [vmem:[%s227] sm:$0xff] %vm469, %v453
        %471 = vst.msk [vmem:[%s227 + $0x8] sm:$0xff] %vm469, %v454
        %472 = vst.msk [vmem:[%s227 + $0x10] sm:$0xff] %vm469, %v455
        %473 = vst.msk [vmem:[%s227 + $0x18] sm:$0xff] %vm469, %v456
        %474 = vst.msk [vmem:[%s227 + $0x20] sm:$0xff] %vm469, %v457
        %475 = vst.msk [vmem:[%s227 + $0x28] sm:$0xff] %vm469, %v458
        %476 = vst.msk [vmem:[%s227 + $0x30] sm:$0xff] %vm469, %v459
        %477 = vst.msk [vmem:[%s227 + $0x38] sm:$0xff] %vm469, %v460
        %478 = vst.msk [vmem:[%s227 + $0x40] sm:$0xff] %vm469, %v461
        %479 = vst.msk [vmem:[%s227 + $0x48] sm:$0xff] %vm469, %v462
        %480 = vst.msk [vmem:[%s227 + $0x50] sm:$0xff] %vm469, %v463
        %481 = vst.msk [vmem:[%s227 + $0x58] sm:$0xff] %vm469, %v464
        %482 = vst.msk [vmem:[%s227 + $0x60] sm:$0xff] %vm469, %v465
        %483 = vst.msk [vmem:[%s227 + $0x68] sm:$0xff] %vm469, %v466
        %484 = vst.msk [vmem:[%s227 + $0x70] sm:$0xff] %vm469, %v467
        %485 = vst.msk [vmem:[%s227 + $0x78] sm:$0xff] %vm469, %v468
        %s486 = sand.u32 %s135, 1
        %s487 = sand.u32 %s135, 1
        %s488 = smul.addr %s487, 128
        %s489 = scalar_lea.vmem [#allocation3], %s488
        // Predicated region
        $region41: #{tpu_custom_call.1} parent=39 // pred_check
          %p490 = pneg %p145
        $region42: #{tpu_custom_call.1} parent=39 // pred_check_branch
          %492 = sbr.rel (%p490) target = $region44
        $region43: #{tpu_custom_call.1} parent=39 // pred_region
          %s493 = smul.u32 16, %s17
          %s494 = ssub.s32 25, %s493
          %p495 = scmp.lt.s32.totalorder %s494, 16
          %s496 = scalar_select %p495, %s494, 16
          %s497 = smul.u32 8, %s496
          %p498 = scmp.ne.s32.totalorder 0, %s497
          %s499 = smul.addr %s493, 8
          %s500 = scalar_lea.vmem %s5, %s499
          // Predicated region
          $region45: #{tpu_custom_call.1} parent=43 // pred_check
            %p501 = pneg %p498
          $region46: #{tpu_custom_call.1} parent=43 // pred_check_branch
            %503 = sbr.rel (%p501) target = $region48
          $region47: #{tpu_custom_call.1} parent=43 // pred_region
            // Predicated region
            $region49: #{tpu_custom_call.1} parent=47 // pred_check
              _
            $region50: #{tpu_custom_call.1} parent=47 // pred_check_branch
              %505 = sbr.rel (0) target = $region52
            $region51: #{tpu_custom_call.1} parent=47 // pred_region
              // Predicated region
              $region71: #{tpu_custom_call.1} parent=51 // pred_check
                _
              $region72: #{tpu_custom_call.1} parent=51 // pred_check_branch
                %585 = sbr.rel (0) target = $region74
              $region73: #{tpu_custom_call.1} parent=51 // pred_region
                %s586 = sshrl.u32 %s496, 4
                // While loop
                $region75: #{tpu_custom_call.1} parent=73 // loop_pre_header
                  _
                $region76: #{tpu_custom_call.1} parent=73 // loop_header
                  %s588 = sphi 0, %s590
                  %p589 = scmp.ge.s32.totalorder %s588, %s586
                  %s593 = sphi 0, %s630
                  %s594 = sphi %s489, %s633
                  %s595 = sphi %s500, %s634
                $region77: #{tpu_custom_call.1} parent=73 // loop_header_branch
                  %592 = sbr.rel (%p589) target = $region81
                $region78: #{tpu_custom_call.1} parent=73 // loop_body
                  %v596 = vld [vmem:[%s594] sm:$0xff]
                  %597 = vst [vmem:[%s595] sm:$0xff] %v596
                  %v598 = vld [vmem:[%s594 + $0x8] sm:$0xff]
                  %599 = vst [vmem:[%s595 + $0x8] sm:$0xff] %v598
                  %v600 = vld [vmem:[%s594 + $0x10] sm:$0xff]
                  %601 = vst [vmem:[%s595 + $0x10] sm:$0xff] %v600
                  %v602 = vld [vmem:[%s594 + $0x18] sm:$0xff]
                  %603 = vst [vmem:[%s595 + $0x18] sm:$0xff] %v602
                  %v604 = vld [vmem:[%s594 + $0x20] sm:$0xff]
                  %605 = vst [vmem:[%s595 + $0x20] sm:$0xff] %v604
                  %v606 = vld [vmem:[%s594 + $0x28] sm:$0xff]
                  %607 = vst [vmem:[%s595 + $0x28] sm:$0xff] %v606
                  %v608 = vld [vmem:[%s594 + $0x30] sm:$0xff]
                  %609 = vst [vmem:[%s595 + $0x30] sm:$0xff] %v608
                  %v610 = vld [vmem:[%s594 + $0x38] sm:$0xff]
                  %611 = vst [vmem:[%s595 + $0x38] sm:$0xff] %v610
                  %v612 = vld [vmem:[%s594 + $0x40] sm:$0xff]
                  %613 = vst [vmem:[%s595 + $0x40] sm:$0xff] %v612
                  %v614 = vld [vmem:[%s594 + $0x48] sm:$0xff]
                  %615 = vst [vmem:[%s595 + $0x48] sm:$0xff] %v614
                  %v616 = vld [vmem:[%s594 + $0x50] sm:$0xff]
                  %617 = vst [vmem:[%s595 + $0x50] sm:$0xff] %v616
                  %v618 = vld [vmem:[%s594 + $0x58] sm:$0xff]
                  %619 = vst [vmem:[%s595 + $0x58] sm:$0xff] %v618
                  %v620 = vld [vmem:[%s594 + $0x60] sm:$0xff]
                  %621 = vst [vmem:[%s595 + $0x60] sm:$0xff] %v620
                  %v622 = vld [vmem:[%s594 + $0x68] sm:$0xff]
                  %623 = vst [vmem:[%s595 + $0x68] sm:$0xff] %v622
                  %v624 = vld [vmem:[%s594 + $0x70] sm:$0xff]
                  %625 = vst [vmem:[%s595 + $0x70] sm:$0xff] %v624
                  %v626 = vld [vmem:[%s594 + $0x78] sm:$0xff]
                  %627 = vst [vmem:[%s595 + $0x78] sm:$0xff] %v626
                  %s628 = sadd.s32 1, %s593
                  %p629 = scmp.ge.s32.totalorder %s628, %s586
                  %s630 = scalar_select %p629, 0, %s628
                  %s631 = smul.u32 %s630, 128
                  %s632 = smul.u32 %s630, 128
                  %s633 = scalar_lea.vmem %s489, %s631 [#allocation3]
                  %s634 = scalar_lea.vmem %s500, %s632
                $region79: #{tpu_custom_call.1} parent=73 // loop_footer
                  %s590 = sadd.s32 %s588, 1
                $region80: #{tpu_custom_call.1} parent=73 // loop_footer_branch
                  %587 = sbr.rel target = $region76
                $region81: #{tpu_custom_call.1} parent=73 // loop_exit
                  _
                %s635 = sshrl.u32 %s496, 4
                %s636 = sand.u32 %s496, 15
                %s637 = smul.u32 %s635, 16
                %s638 = smul.u32 8, %s637
                %s639 = scalar_lea.vmem %s489, %s638 [#allocation3]
                %s640 = smul.u32 8, %s637
                %s641 = scalar_lea.vmem %s500, %s640
                // While loop
                $region82: #{tpu_custom_call.1} parent=73 // loop_pre_header
                  _
                $region83: #{tpu_custom_call.1} parent=73 // loop_header
                  %s643 = sphi 0, %s645
                  %p644 = scmp.ge.s32.totalorder %s643, %s636
                  %s648 = sphi 0, %s655
                  %s649 = sphi %s639, %s658
                  %s650 = sphi %s641, %s659
                $region84: #{tpu_custom_call.1} parent=73 // loop_header_branch
                  %647 = sbr.rel (%p644) target = $region88
                $region85: #{tpu_custom_call.1} parent=73 // loop_body
                  %v651 = vld [vmem:[%s649] sm:$0xff]
                  %652 = vst [vmem:[%s650] sm:$0xff] %v651
                  %s653 = sadd.s32 1, %s648
                  %p654 = scmp.ge.s32.totalorder %s653, %s636
                  %s655 = scalar_select %p654, 0, %s653
                  %s656 = smul.u32 %s655, 8
                  %s657 = smul.u32 %s655, 8
                  %s658 = scalar_lea.vmem %s639, %s656 [#allocation3]
                  %s659 = scalar_lea.vmem %s641, %s657
                $region86: #{tpu_custom_call.1} parent=73 // loop_footer
                  %s645 = sadd.s32 %s643, 1
                $region87: #{tpu_custom_call.1} parent=73 // loop_footer_branch
                  %642 = sbr.rel target = $region83
                $region88: #{tpu_custom_call.1} parent=73 // loop_exit
                  _
              $region74: #{tpu_custom_call.1} parent=51 // pred_fallthru
                _
              // Predicated region
              $region89: #{tpu_custom_call.1} parent=51 // pred_check
                _
              $region90: #{tpu_custom_call.1} parent=51 // pred_check_branch
                %661 = sbr.rel target = $region92
              $region91: #{tpu_custom_call.1} parent=51 // pred_region
                _
              $region92: #{tpu_custom_call.1} parent=51 // pred_fallthru
                _
            $region52: #{tpu_custom_call.1} parent=47 // pred_fallthru
              _
            // Predicated region
            $region53: #{tpu_custom_call.1} parent=47 // pred_check
              _
            $region54: #{tpu_custom_call.1} parent=47 // pred_check_branch
              %507 = sbr.rel target = $region56
            $region55: #{tpu_custom_call.1} parent=47 // pred_region
              %s509 = ssub.s32 256, 1
              %s510 = sshrl.u32 %s496, 4
              // While loop
              $region57: #{tpu_custom_call.1} parent=55 // loop_pre_header
                _
              $region58: #{tpu_custom_call.1} parent=55 // loop_header
                %s512 = sphi 0, %s514
                %p513 = scmp.ge.s32.totalorder %s512, %s510
                %s517 = sphi 0, %s554
                %s518 = sphi %s489, %s557
                %s519 = sphi %s500, %s558
              $region59: #{tpu_custom_call.1} parent=55 // loop_header_branch
                %516 = sbr.rel (%p513) target = $region63
              $region60: #{tpu_custom_call.1} parent=55 // loop_body
                %v520 = vld [vmem:[%s518] sm:%s509]
                %521 = vst [vmem:[%s519] sm:%s509] %v520
                %v522 = vld [vmem:[%s518 + $0x8] sm:%s509]
                %523 = vst [vmem:[%s519 + $0x8] sm:%s509] %v522
                %v524 = vld [vmem:[%s518 + $0x10] sm:%s509]
                %525 = vst [vmem:[%s519 + $0x10] sm:%s509] %v524
                %v526 = vld [vmem:[%s518 + $0x18] sm:%s509]
                %527 = vst [vmem:[%s519 + $0x18] sm:%s509] %v526
                %v528 = vld [vmem:[%s518 + $0x20] sm:%s509]
                %529 = vst [vmem:[%s519 + $0x20] sm:%s509] %v528
                %v530 = vld [vmem:[%s518 + $0x28] sm:%s509]
                %531 = vst [vmem:[%s519 + $0x28] sm:%s509] %v530
                %v532 = vld [vmem:[%s518 + $0x30] sm:%s509]
                %533 = vst [vmem:[%s519 + $0x30] sm:%s509] %v532
                %v534 = vld [vmem:[%s518 + $0x38] sm:%s509]
                %535 = vst [vmem:[%s519 + $0x38] sm:%s509] %v534
                %v536 = vld [vmem:[%s518 + $0x40] sm:%s509]
                %537 = vst [vmem:[%s519 + $0x40] sm:%s509] %v536
                %v538 = vld [vmem:[%s518 + $0x48] sm:%s509]
                %539 = vst [vmem:[%s519 + $0x48] sm:%s509] %v538
                %v540 = vld [vmem:[%s518 + $0x50] sm:%s509]
                %541 = vst [vmem:[%s519 + $0x50] sm:%s509] %v540
                %v542 = vld [vmem:[%s518 + $0x58] sm:%s509]
                %543 = vst [vmem:[%s519 + $0x58] sm:%s509] %v542
                %v544 = vld [vmem:[%s518 + $0x60] sm:%s509]
                %545 = vst [vmem:[%s519 + $0x60] sm:%s509] %v544
                %v546 = vld [vmem:[%s518 + $0x68] sm:%s509]
                %547 = vst [vmem:[%s519 + $0x68] sm:%s509] %v546
                %v548 = vld [vmem:[%s518 + $0x70] sm:%s509]
                %549 = vst [vmem:[%s519 + $0x70] sm:%s509] %v548
                %v550 = vld [vmem:[%s518 + $0x78] sm:%s509]
                %551 = vst [vmem:[%s519 + $0x78] sm:%s509] %v550
                %s552 = sadd.s32 1, %s517
                %p553 = scmp.ge.s32.totalorder %s552, %s510
                %s554 = scalar_select %p553, 0, %s552
                %s555 = smul.u32 %s554, 128
                %s556 = smul.u32 %s554, 128
                %s557 = scalar_lea.vmem %s489, %s555 [#allocation3]
                %s558 = scalar_lea.vmem %s500, %s556
              $region61: #{tpu_custom_call.1} parent=55 // loop_footer
                %s514 = sadd.s32 %s512, 1
              $region62: #{tpu_custom_call.1} parent=55 // loop_footer_branch
                %511 = sbr.rel target = $region58
              $region63: #{tpu_custom_call.1} parent=55 // loop_exit
                _
              %s559 = sshrl.u32 %s496, 4
              %s560 = sand.u32 %s496, 15
              %s561 = smul.u32 %s559, 16
              %s562 = smul.u32 8, %s561
              %s563 = scalar_lea.vmem %s489, %s562 [#allocation3]
              %s564 = smul.u32 8, %s561
              %s565 = scalar_lea.vmem %s500, %s564
              // While loop
              $region64: #{tpu_custom_call.1} parent=55 // loop_pre_header
                _
              $region65: #{tpu_custom_call.1} parent=55 // loop_header
                %s567 = sphi 0, %s569
                %p568 = scmp.ge.s32.totalorder %s567, %s560
                %s572 = sphi 0, %s579
                %s573 = sphi %s563, %s582
                %s574 = sphi %s565, %s583
              $region66: #{tpu_custom_call.1} parent=55 // loop_header_branch
                %571 = sbr.rel (%p568) target = $region70
              $region67: #{tpu_custom_call.1} parent=55 // loop_body
                %v575 = vld [vmem:[%s573] sm:%s509]
                %576 = vst [vmem:[%s574] sm:%s509] %v575
                %s577 = sadd.s32 1, %s572
                %p578 = scmp.ge.s32.totalorder %s577, %s560
                %s579 = scalar_select %p578, 0, %s577
                %s580 = smul.u32 %s579, 8
                %s581 = smul.u32 %s579, 8
                %s582 = scalar_lea.vmem %s563, %s580 [#allocation3]
                %s583 = scalar_lea.vmem %s565, %s581
              $region68: #{tpu_custom_call.1} parent=55 // loop_footer
                %s569 = sadd.s32 %s567, 1
              $region69: #{tpu_custom_call.1} parent=55 // loop_footer_branch
                %566 = sbr.rel target = $region65
              $region70: #{tpu_custom_call.1} parent=55 // loop_exit
                _
            $region56: #{tpu_custom_call.1} parent=47 // pred_fallthru
              _
          $region48: #{tpu_custom_call.1} parent=43 // pred_fallthru
            _
          %662 = vnop
        $region44: #{tpu_custom_call.1} parent=39 // pred_fallthru
          _
      $region40: #{tpu_custom_call.1} parent=5 // pred_fallthru
        _
      %p663 = scmp.le.s32.totalorder 2, %s12
      // Predicated region
      $region93: #{tpu_custom_call.1} parent=5 // pred_check
        %p664 = pneg %p663
      $region94: #{tpu_custom_call.1} parent=5 // pred_check_branch
        %666 = sbr.rel (%p664) target = $region96
      $region95: #{tpu_custom_call.1} parent=5 // pred_region
        %s667 = ssub.s32 %s12, 2
        // Predicated region
        $region97: #{tpu_custom_call.1} parent=95 // pred_check
          %p668 = pneg %p151
        $region98: #{tpu_custom_call.1} parent=95 // pred_check_branch
          %670 = sbr.rel (%p668) target = $region100
        $region99: #{tpu_custom_call.1} parent=95 // pred_region
          %s671 = sand.u32 %s136, 1
          %s672 = sand.u32 %s136, 1
          %s673 = smul.addr %s672, 128
          %s674 = scalar_lea.vmem [#allocation3], %s673
        $region100: #{tpu_custom_call.1} parent=95 // pred_fallthru
          _
      $region96: #{tpu_custom_call.1} parent=5 // pred_fallthru
        _
    $region6: #{tpu_custom_call.1} parent=1 // loop_footer
      %s16 = sadd.s32 1, %s12
    $region7: #{tpu_custom_call.1} parent=1 // loop_footer_branch
      %11 = sbr.rel target = $region3
    $region8: #{tpu_custom_call.1} parent=1 // loop_exit
      _

</llo_original>
